<compile_context>
chip_gen: v5e
topology: v5e:2x2
jax: 0.10.0
libtpu: 0.0.40
codegen_flags: <defaults>
</compile_context>

<pallas_src>
import functools

import jax
import jax.numpy as jnp
from jax.experimental import pallas as pl
from jax.experimental.pallas import tpu as pltpu


def _round_up(x: int, m: int) -> int:
    return ((x + m - 1) // m) * m


def _adaptive_avg_pool_matrix(seq_len: int, dest_len: int) -> jnp.ndarray:
    """P[i, j] = 1/(end_i - start_i) for start_i <= j < end_i, else 0.

    Matches torch.nn.functional.adaptive_avg_pool1d window rules:
      start_i = floor(i * L_in / L_out), end_i = ceil((i+1) * L_in / L_out)
    """
    i = jnp.arange(dest_len)
    start = (i * seq_len) // dest_len                        # floor
    end = -((-(i + 1) * seq_len) // dest_len)                # ceil
    j = jnp.arange(seq_len)
    mask = (j[None, :] >= start[:, None]) & (j[None, :] < end[:, None])
    counts = (end - start).astype(jnp.float32)[:, None]
    return jnp.where(mask, 1.0 / counts, 0.0).astype(jnp.float32)


def _pick_tb(B, d_pad, s, f_in, f_out_pad, itemsize,
             target_rows=256, vmem_budget=24 * 1024 * 1024):
    """Largest divisor TB of B with TB*d_pad <= target_rows (MXU-friendly M)
    whose per-step blocks (double-buffered) fit a conservative VMEM budget."""
    def fits(tb):
        x_bytes = tb * s * f_in * itemsize
        out_bytes = tb * d_pad * f_out_pad * 4
        const_bytes = (d_pad * s + f_in * f_out_pad) * itemsize + f_out_pad * 4
        return 2 * (x_bytes + out_bytes + const_bytes) <= vmem_budget

    tb = max(1, min(B, max(1, target_rows // d_pad)))
    while tb > 1 and (B % tb != 0 or not fits(tb)):
        tb -= 1
    return tb


def _pooler_kernel(p_ref, x_ref, wt_ref, b_ref, o_ref, *, tb, precision):
    # p_ref:  (D_pad, S)            pooling matrix (resident across grid)
    # x_ref:  (TB, S, F_in)         TB batch elements
    # wt_ref: (F_in, F_out_pad)     pre-transposed Linear weight (resident)
    # b_ref:  (1, F_out_pad)        Linear bias (f32, resident)
    # o_ref:  (TB*D_pad, F_out_pad) lane-dense flattened output slab
    p = p_ref[...]
    # Pool each batch element (static unroll over TB), then flatten the batch
    # into the M dimension of the Linear matmul.
    pooled = jnp.concatenate(
        [jnp.dot(p, x_ref[b], preferred_element_type=jnp.float32,
                 precision=precision)
         for b in range(tb)],
        axis=0)                                              # (TB*D_pad, F_in)
    out = jnp.dot(pooled.astype(wt_ref.dtype), wt_ref[...],
                  preferred_element_type=jnp.float32,
                  precision=precision) + b_ref[...]          # (TB*D_pad, F_out_pad)
    o_ref[...] = out.astype(o_ref.dtype)


def average_pooler(x, dest_len, weight, bias, *, use_bf16=False, precision=None):
    """x: (B, S, F_in); weight: (F_out, F_in) [PyTorch Linear layout]; bias: (F_out,).

    Set use_bf16=True on v6e/v7x for MXU throughput (f32 accumulation kept);
    set precision=jax.lax.Precision.HIGHEST for exact f32 parity if required.
    """
    B, S, F_in = x.shape
    F_out = weight.shape[0]

    d_pad = _round_up(max(dest_len, 1), 8)       # sublane-aligned pooled length
    f_out_pad = _round_up(F_out, 128)            # lane-dense output width

    # Pooling matrix, zero-padded rows (padding rows are sliced off below).
    p = _adaptive_avg_pool_matrix(S, dest_len)
    p = jnp.pad(p, ((0, d_pad - dest_len), (0, 0)))

    # Pre-transpose the Linear weight (no in-kernel .T); pad F_out to 128-multiple.
    wt = jnp.pad(weight.T, ((0, 0), (0, f_out_pad - F_out)))
    b2 = jnp.pad(bias, (0, f_out_pad - F_out)).reshape(1, f_out_pad).astype(jnp.float32)

    compute_dtype = jnp.bfloat16 if use_bf16 else x.dtype
    x_c = x.astype(compute_dtype)
    p = p.astype(compute_dtype)
    wt = wt.astype(compute_dtype)

    itemsize = jnp.dtype(compute_dtype).itemsize
    tb = _pick_tb(B, d_pad, S, F_in, f_out_pad, itemsize)
    grid = (B // tb,)

    # Explicit VMEM budget with headroom (double-buffered x/out + resident
    # consts), capped at 64 MiB so the request is valid on v7x.
    x_bytes = tb * S * F_in * itemsize
    out_bytes = tb * d_pad * f_out_pad * jnp.dtype(x.dtype).itemsize
    const_bytes = (d_pad * S + F_in * f_out_pad) * itemsize + f_out_pad * 4
    vmem_limit = int(min(max(3 * (x_bytes + out_bytes + const_bytes),
                             32 * 1024 * 1024),
                         64 * 1024 * 1024))

    kernel = functools.partial(_pooler_kernel, tb=tb, precision=precision)

    out2d = pl.pallas_call(
        kernel,
        out_shape=jax.ShapeDtypeStruct((B * d_pad, f_out_pad), x.dtype),
        grid_spec=pltpu.PrefetchScalarGridSpec(
            num_scalar_prefetch=0,
            grid=grid,
            in_specs=[
                pl.BlockSpec((d_pad, S), lambda i: (0, 0)),         # P (resident)
                pl.BlockSpec((tb, S, F_in), lambda i: (i, 0, 0)),   # x batch block
                pl.BlockSpec((F_in, f_out_pad), lambda i: (0, 0)),  # W^T (resident)
                pl.BlockSpec((1, f_out_pad), lambda i: (0, 0)),     # bias (resident)
            ],
            out_specs=pl.BlockSpec((tb * d_pad, f_out_pad), lambda i: (i, 0)),
        ),
        compiler_params=pltpu.CompilerParams(
            dimension_semantics=("parallel",),
            vmem_limit_bytes=vmem_limit),
    )(p, x_c, wt, b2)

    # Strip sublane/lane padding, restore (B, dest_len, F_out).
    return out2d.reshape(B, d_pad, f_out_pad)[:, :dest_len, :F_out]


def _reference(x, dest_len, weight, bias):
    pool_mat = _adaptive_avg_pool_matrix(x.shape[1], dest_len)
    pooled = jnp.einsum("ds,bsf->bdf", pool_mat, x)
    return jnp.einsum("bdf,of->bdo", pooled, weight) + bias


if __name__ == "__main__":
    # Small shapes consistent with the module's forward:
    B, S, F_in, F_out = 2, 16, 32, 64
    dest_len = 6  # uneven adaptive-pool windows (3,4,3,3,4,3)

    key = jax.random.PRNGKey(0)
    kx, kw, kb = jax.random.split(key, 3)
    x = jax.random.normal(kx, (B, S, F_in), dtype=jnp.float32)
    # Deterministic Linear(in_features, out_features) params (PyTorch layout: (out, in)).
    weight = jax.random.normal(kw, (F_out, F_in), dtype=jnp.float32) * 0.02
    bias = jax.random.normal(kb, (F_out,), dtype=jnp.float32) * 0.02

    out = average_pooler(x, dest_len, weight, bias)
    out = jax.block_until_ready(out)

    ref = _reference(x, dest_len, weight, bias)
    assert out.shape == (B, dest_len, F_out)
    assert jnp.allclose(out, ref, atol=1e-5, rtol=1e-5)

    print("KERNEL_OK")
</pallas_src>

<mosaic_0001>
module attributes {stable_mosaic.version = 11 : i64} {
  func.func @_pooler_kernel(%arg0: i32, %arg1: memref<8x16xf32, #tpu.memory_space<vmem>>, %arg2: memref<2x16x32xf32, #tpu.memory_space<vmem>>, %arg3: memref<32x128xf32, #tpu.memory_space<vmem>>, %arg4: memref<1x128xf32, #tpu.memory_space<vmem>>, %arg5: memref<16x128xf32, #tpu.memory_space<vmem>>) attributes {dimension_semantics = [#tpu.dimension_semantics<parallel>], iteration_bounds = array<i64: 1>, scalar_prefetch = 0 : i64, scratch_operands = 0 : i64, tpu.core_type = #tpu.core_type<tc>, window_params = [{pipeline_mode = #tpu.pipeline_mode<synchronous>, transform_indices = @transform_0, window_bounds = array<i64: 8, 16>}, {transform_indices = @transform_1, window_bounds = array<i64: 2, 16, 32>}, {pipeline_mode = #tpu.pipeline_mode<synchronous>, transform_indices = @transform_2, window_bounds = array<i64: 32, 128>}, {pipeline_mode = #tpu.pipeline_mode<synchronous>, transform_indices = @transform_3, window_bounds = array<i64: 1, 128>}, {transform_indices = @transform_4, window_bounds = array<i64: 16, 128>}]} {
    %c0 = arith.constant 0 : index
    %c0_0 = arith.constant 0 : index
    %0 = vector.load %arg1[%c0, %c0_0] : memref<8x16xf32, #tpu.memory_space<vmem>>, vector<8x16xf32>
    %c0_1 = arith.constant 0 : index
    %c0_2 = arith.constant 0 : index
    %c0_3 = arith.constant 0 : index
    %1 = vector.load %arg2[%c0_1, %c0_2, %c0_3] : memref<2x16x32xf32, #tpu.memory_space<vmem>>, vector<1x16x32xf32>
    %2 = vector.shape_cast %1 : vector<1x16x32xf32> to vector<16x32xf32>
    %cst = arith.constant dense<0.000000e+00> : vector<8x32xf32>
    %3 = tpu.matmul %0, %2, %cst {dimension_numbers = #tpu.dot_dimension_numbers<[1], [0], [0], [1], [0, 0, 1, 1], [], []>} : vector<8x16xf32>, vector<16x32xf32>, vector<8x32xf32> -> vector<8x32xf32>
    %c1 = arith.constant 1 : index
    %c0_4 = arith.constant 0 : index
    %c0_5 = arith.constant 0 : index
    %4 = vector.load %arg2[%c1, %c0_4, %c0_5] : memref<2x16x32xf32, #tpu.memory_space<vmem>>, vector<1x16x32xf32>
    %5 = vector.shape_cast %4 : vector<1x16x32xf32> to vector<16x32xf32>
    %cst_6 = arith.constant dense<0.000000e+00> : vector<8x32xf32>
    %6 = tpu.matmul %0, %5, %cst_6 {dimension_numbers = #tpu.dot_dimension_numbers<[1], [0], [0], [1], [0, 0, 1, 1], [], []>} : vector<8x16xf32>, vector<16x32xf32>, vector<8x32xf32> -> vector<8x32xf32>
    %7 = tpu.concatenate %3, %6 in 0 : vector<8x32xf32>, vector<8x32xf32> -> vector<16x32xf32>
    %c0_7 = arith.constant 0 : index
    %c0_8 = arith.constant 0 : index
    %8 = vector.load %arg3[%c0_7, %c0_8] : memref<32x128xf32, #tpu.memory_space<vmem>>, vector<32x128xf32>
    %cst_9 = arith.constant dense<0.000000e+00> : vector<16x128xf32>
    %9 = tpu.matmul %7, %8, %cst_9 {dimension_numbers = #tpu.dot_dimension_numbers<[1], [0], [0], [1], [0, 0, 1, 1], [], []>} : vector<16x32xf32>, vector<32x128xf32>, vector<16x128xf32> -> vector<16x128xf32>
    %c0_10 = arith.constant 0 : index
    %c0_11 = arith.constant 0 : index
    %10 = vector.load %arg4[%c0_10, %c0_11] : memref<1x128xf32, #tpu.memory_space<vmem>>, vector<1x128xf32>
    %11 = vector.broadcast %10 : vector<1x128xf32> to vector<16x128xf32>
    %12 = arith.addf %9, %11 : vector<16x128xf32>
    %c0_12 = arith.constant 0 : index
    %c0_13 = arith.constant 0 : index
    %13 = vector.load %arg5[%c0_12, %c0_13] : memref<16x128xf32, #tpu.memory_space<vmem>>, vector<16x128xf32>
    tpu.vector_store %arg5[%c0_12, %c0_13], %12 {strides = array<i32>} : memref<16x128xf32, #tpu.memory_space<vmem>>, vector<16x128xf32>,
    return
  }
  func.func @transform_0(%arg0: i32) -> (i32, i32) {
    %c0_i32 = arith.constant 0 : i32
    %c0_i32_0 = arith.constant 0 : i32
    %c0_i32_1 = arith.constant 0 : i32
    return %c0_i32, %c0_i32_0 : i32, i32
  }
  func.func @transform_1(%arg0: i32) -> (i32, i32, i32) {
    %c0_i32 = arith.constant 0 : i32
    %c0_i32_0 = arith.constant 0 : i32
    %c0_i32_1 = arith.constant 0 : i32
    return %arg0, %c0_i32, %c0_i32_0 : i32, i32, i32
  }
  func.func @transform_2(%arg0: i32) -> (i32, i32) {
    %c0_i32 = arith.constant 0 : i32
    %c0_i32_0 = arith.constant 0 : i32
    %c0_i32_1 = arith.constant 0 : i32
    return %c0_i32, %c0_i32_0 : i32, i32
  }
  func.func @transform_3(%arg0: i32) -> (i32, i32) {
    %c0_i32 = arith.constant 0 : i32
    %c0_i32_0 = arith.constant 0 : i32
    %c0_i32_1 = arith.constant 0 : i32
    return %c0_i32, %c0_i32_0 : i32, i32
  }
  func.func @transform_4(%arg0: i32) -> (i32, i32) {
    %c0_i32 = arith.constant 0 : i32
    %c0_i32_0 = arith.constant 0 : i32
    return %arg0, %c0_i32 : i32, i32
  }
}

</mosaic_0001>

<llo_original>
// kernel: tpu_custom_call.1
$region0: #{tpu_custom_call.1}
  #allocation0 [shape = 'u32[]', space=smem, size = 0x4, offset = 0x4, fixed_abs, tag = 'smem constant byte address 0x4 - core index']
  #allocation1 [shape = 'u32[72,128]{1,0:T(1,128)}', space=vmem, size = 0x9000, scoped, tag = 'internal scratch']
  %s0 = inlined_call_operand.hbm [shape: f32[8,16], index: 0, kind: input, shape index: {}]
  %s1 = inlined_call_operand.hbm [shape: f32[2,16,32], index: 1, kind: input, shape index: {}]
  %s2 = inlined_call_operand.hbm [shape: f32[32,128], index: 2, kind: input, shape index: {}]
  %s3 = inlined_call_operand.vmem [shape: f32[1,128], index: 3, kind: input, shape index: {}]
  %s4 = inlined_call_operand.hbm [shape: f32[16,128], index: 4, kind: output, shape index: {}]
  %s5 = sld [smem:[#allocation0]]
  $region38: #{tpu_custom_call.1} parent=0
    _
  %s7 = ssub.s32 1, %s5
  %s8 = scalar_select 0, %s7, %s5
  $region1: #{tpu_custom_call.1} parent=0
    #allocation2 [shape = 'u8[4096]{0}', space=vmem, size = 0x1000, scoped, tag = 'input window, operand 0, single buffered']
    #allocation3 [shape = 's32[1]{0}', space=sflag, size = 0x4, scoped, tag = 'scoped memory for tpu_custom_call.1']
    #allocation4 [shape = 's32[1]{0}', space=sflag, size = 0x4, scoped, tag = 'scoped memory for tpu_custom_call.1']
    #allocation5 [shape = 'u8[16384]{0}', space=vmem, size = 0x4000, scoped, tag = 'input window, operand 1, single buffered']
    #allocation6 [shape = 's32[1]{0}', space=sflag, size = 0x4, scoped, tag = 'scoped memory for tpu_custom_call.1']
    #allocation7 [shape = 'u8[16384]{0}', space=vmem, size = 0x4000, scoped, tag = 'input window, operand 2, single buffered']
    #allocation8 [shape = 'u8[8192]{0}', space=vmem, size = 0x2000, scoped, tag = 'output window, operand 0, single buffered']
    %9 = vsyncpa [#allocation3], 0
    %10 = vsyncpa [#allocation6], 0
    %11 = vsyncpa [#allocation4], 0
    // Predicated region
    $region2: #{tpu_custom_call.1} parent=1 // pred_check
      _
    $region3: #{tpu_custom_call.1} parent=1 // pred_check_branch
      %13 = sbr.rel (0) target = $region5
    $region4: #{tpu_custom_call.1} parent=1 // pred_region
      %15 = vsyncadd [#allocation3], 0
      %s17 = sshll.u32 %s0, 4
      %s18 = int_to_ptr.hbm [resolvable:$true] %s17
      %s19 = sshll.u32 [#allocation2], 4
      %s20 = int_to_ptr.vmem [resolvable:$true] %s19
      %22 = dma.hbm_to_vmem [thread:$0]  %s18, 128, %s20, [#allocation3]
    $region5: #{tpu_custom_call.1} parent=1 // pred_fallthru
      _
    // Predicated region
    $region6: #{tpu_custom_call.1} parent=1 // pred_check
      _
    $region7: #{tpu_custom_call.1} parent=1 // pred_check_branch
      %24 = sbr.rel (0) target = $region9
    $region8: #{tpu_custom_call.1} parent=1 // pred_region
      %26 = vsyncadd [#allocation6], 0
      %s27 = sshll.u32 %s1, 4
      %s28 = int_to_ptr.hbm [resolvable:$true] %s27
      %s29 = sshll.u32 [#allocation5], 4
      %s30 = int_to_ptr.vmem [resolvable:$true] %s29
      %35 = dma.hbm_to_vmem [thread:$0]  %s28, 512, %s30, [#allocation6], 128, 128, 8
    $region9: #{tpu_custom_call.1} parent=1 // pred_fallthru
      _
    // Predicated region
    $region10: #{tpu_custom_call.1} parent=1 // pred_check
      _
    $region11: #{tpu_custom_call.1} parent=1 // pred_check_branch
      %37 = sbr.rel (0) target = $region13
    $region12: #{tpu_custom_call.1} parent=1 // pred_region
      %39 = vsyncadd [#allocation6], 0
      %s40 = sshll.u32 %s2, 4
      %s41 = int_to_ptr.hbm [resolvable:$true] %s40
      %s42 = sshll.u32 [#allocation7], 4
      %s43 = int_to_ptr.vmem [resolvable:$true] %s42
      %48 = dma.hbm_to_vmem [thread:$0]  %s41, 512, %s43, [#allocation6], 128, 128, 8
    $region13: #{tpu_custom_call.1} parent=1 // pred_fallthru
      _
    // Predicated region
    $region14: #{tpu_custom_call.1} parent=1 // pred_check
      _
    $region15: #{tpu_custom_call.1} parent=1 // pred_check_branch
      %50 = sbr.rel (0) target = $region17
    $region16: #{tpu_custom_call.1} parent=1 // pred_region
      _
    $region17: #{tpu_custom_call.1} parent=1 // pred_fallthru
      _
    // Predicated region
    $region18: #{tpu_custom_call.1} parent=1 // pred_check
      _
    $region19: #{tpu_custom_call.1} parent=1 // pred_check_branch
      %52 = sbr.rel (0) target = $region21
    $region20: #{tpu_custom_call.1} parent=1 // pred_region
      %54 = dma.done [#allocation3], 128
    $region21: #{tpu_custom_call.1} parent=1 // pred_fallthru
      _
    // Predicated region
    $region22: #{tpu_custom_call.1} parent=1 // pred_check
      _
    $region23: #{tpu_custom_call.1} parent=1 // pred_check_branch
      %56 = sbr.rel (0) target = $region25
    $region24: #{tpu_custom_call.1} parent=1 // pred_region
      %58 = dma.done [#allocation6], 512
    $region25: #{tpu_custom_call.1} parent=1 // pred_fallthru
      _
    // Predicated region
    $region26: #{tpu_custom_call.1} parent=1 // pred_check
      _
    $region27: #{tpu_custom_call.1} parent=1 // pred_check_branch
      %60 = sbr.rel (0) target = $region29
    $region28: #{tpu_custom_call.1} parent=1 // pred_region
      %62 = dma.done [#allocation6], 512
    $region29: #{tpu_custom_call.1} parent=1 // pred_fallthru
      _
    %v63 = vld [vmem:[#allocation2] sm:$0xff]
    %v64 = vld [vmem:[#allocation5] sm:$0xff]
    %v65 = vld [vmem:[#allocation5 + $0x8] sm:$0xff]
    %vm66 = vcmask 130048
    %v68 = vsel %vm66, %v63, 0
    %70 = vmatpush.msra.mxu0 0.0
    %71 = vmatpush.msra.mxu0 0.0
    %72 = vmatpush.msra.mxu0 0.0
    %73 = vmatpush.msra.mxu0 0.0
    %74 = vmatpush.msra.mxu0 0.0
    %75 = vmatpush.msra.mxu0 0.0
    %76 = vmatpush.msra.mxu0 0.0
    %77 = vmatpush.msra.mxu0 0.0
    %78 = vmatpush.msra.mxu0 0.0
    %79 = vmatpush.msra.mxu0 0.0
    %80 = vmatpush.msra.mxu0 0.0
    %81 = vmatpush.msra.mxu0 0.0
    %82 = vmatpush.msra.mxu0 0.0
    %83 = vmatpush.msra.mxu0 0.0
    %84 = vmatpush.msra.mxu0 %v65
    %85 = vmatpush.msra.mxu0 %v64
    %86 = vmatmul.f32.gmra.mxu0 %v68
    %v87 = vpop.f32.mrf.mxu0
    %v88 = vadd.f32 0.0, %v87
    %89 = vdwg.mxu0
    %s90 = scalar_lea.vmem [#allocation5], 16
    %v91 = vld [vmem:[%s90] sm:$0xff]
    %v92 = vld [vmem:[%s90 + $0x8] sm:$0xff]
    %93 = vmatpush.msra.mxu0 0.0
    %94 = vmatpush.msra.mxu0 0.0
    %95 = vmatpush.msra.mxu0 0.0
    %96 = vmatpush.msra.mxu0 0.0
    %97 = vmatpush.msra.mxu0 0.0
    %98 = vmatpush.msra.mxu0 0.0
    %99 = vmatpush.msra.mxu0 0.0
    %100 = vmatpush.msra.mxu0 0.0
    %101 = vmatpush.msra.mxu0 0.0
    %102 = vmatpush.msra.mxu0 0.0
    %103 = vmatpush.msra.mxu0 0.0
    %104 = vmatpush.msra.mxu0 0.0
    %105 = vmatpush.msra.mxu0 0.0
    %106 = vmatpush.msra.mxu0 0.0
    %107 = vmatpush.msra.mxu0 %v92
    %108 = vmatpush.msra.mxu0 %v91
    %109 = vmatmul.f32.gmra.mxu0 %v68
    %v110 = vpop.f32.mrf.mxu0
    %v111 = vadd.f32 0.0, %v110
    %112 = vdwg.mxu0
    %v113 = vld [vmem:[#allocation7] sm:$0xff]
    %v114 = vld [vmem:[#allocation7 + $0x8] sm:$0xff]
    %v115 = vld [vmem:[#allocation7 + $0x10] sm:$0xff]
    %v116 = vld [vmem:[#allocation7 + $0x18] sm:$0xff]
    %v117 = vld [vmem:[%s3] sm:$0x1]
    %v119 = vperm.slane %v117, 0
    %vm121 = vcmask 261120
    %v123 = vsel %vm121, %v88, 0
    %v126 = vsel %vm121, %v111, 0
    %128 = vmatpush.msra.mxu0 0.0
    %129 = vmatpush.msra.mxu0 0.0
    %130 = vmatpush.msra.mxu0 0.0
    %131 = vmatpush.msra.mxu0 0.0
    %132 = vmatpush.msra.mxu0 0.0
    %133 = vmatpush.msra.mxu0 0.0
    %134 = vmatpush.msra.mxu0 0.0
    %135 = vmatpush.msra.mxu0 0.0
    %136 = vmatpush.msra.mxu0 0.0
    %137 = vmatpush.msra.mxu0 0.0
    %138 = vmatpush.msra.mxu0 0.0
    %139 = vmatpush.msra.mxu0 0.0
    %140 = vmatpush.msra.mxu0 %v116
    %141 = vmatpush.msra.mxu0 %v115
    %142 = vmatpush.msra.mxu0 %v114
    %143 = vmatpush.msra.mxu0 %v113
    %144 = vmatmul.f32.gmra.mxu0 %v123
    %v145 = vpop.f32.mrf.mxu0
    %v146 = vadd.f32 %v119, %v145
    %147 = vmatmul.f32.gmra.mxu0 %v126
    %v148 = vpop.f32.mrf.mxu0
    %v149 = vadd.f32 %v119, %v148
    %150 = vdwg.mxu0
    %151 = vst [vmem:[#allocation8] sm:$0xff] %v146
    %152 = vst [vmem:[#allocation8 + $0x8] sm:$0xff] %v149
    // Predicated region
    $region30: #{tpu_custom_call.1} parent=1 // pred_check
      _
    $region31: #{tpu_custom_call.1} parent=1 // pred_check_branch
      %154 = sbr.rel (0) target = $region33
    $region32: #{tpu_custom_call.1} parent=1 // pred_region
      %156 = vsyncadd [#allocation4], 0
      %s157 = sshll.u32 [#allocation8], 4
      %s158 = int_to_ptr.vmem [resolvable:$true] %s157
      %s159 = sshll.u32 %s4, 4
      %s160 = int_to_ptr.hbm [resolvable:$true] %s159
      %165 = dma.vmem_to_hbm [thread:$0]  %s158, 256, %s160, [#allocation4], 128, 128, 8
    $region33: #{tpu_custom_call.1} parent=1 // pred_fallthru
      _
    // Predicated region
    $region34: #{tpu_custom_call.1} parent=1 // pred_check
      _
    $region35: #{tpu_custom_call.1} parent=1 // pred_check_branch
      %167 = sbr.rel (0) target = $region37
    $region36: #{tpu_custom_call.1} parent=1 // pred_region
      %169 = dma.done [#allocation4], 256
    $region37: #{tpu_custom_call.1} parent=1 // pred_fallthru
      _
    %170 = vsyncpa [#allocation3], 1
    %171 = vsyncpa [#allocation6], 1
    %172 = vsyncpa [#allocation4], 1

</llo_original>
